<compile_context>
chip_gen: v7x
topology: tpu7x:2x2x1
jax: 0.10.0
libtpu: 0.0.40
codegen_flags: <defaults>
</compile_context>

<pallas_src>
import jax
import jax.numpy as jnp
import numpy as np
from jax.experimental import pallas as pl
from jax.experimental.pallas import tpu as pltpu

MAX_LENGTH = 25
PAD_LENGTH = 32            # MAX_LENGTH padded up for aligned sublane/lane handling
HIDDEN = 32
OUTPUT_SIZE = 100          # vocab size ("output_size" of the module)
WEIGHT_LANES = 128         # all packed weight operands are 128 lanes wide
OUT_LANES = 128            # single lane-dense packed output row per step


def attn_decoder_kernel(
    toks_ref,                # (T,) int32 scalar-prefetch (consumed by index_maps only)
    emb_ref,                 # (1, 1, H)   gathered embedding row E[toks[s]]
    h0_ref,                  # (1, H)      initial hidden[0]
    enc_ref,                 # (Lp, H)     zero-padded encoder_outputs (VMEM-resident)
    wac_ref,                 # (2H, 128)   [Wa_pad | Wc | 0]
    wg_ref,                  # (2H, 128)   [Wih ; Whh] padded to 128 lanes (gate order r,z,n)
    b_ref,                   # (8, 128)    row0: ba_pad, row1: bc, row2: bih, row3: bhh,
                             #             row4: Wo as a row, row5[0]: bo
    out_ref,                 # (1, 1, 128) packed row for this step:
                             #             [attnw_pad(32) | hnew(32) | out bcast(64)]
    h_scratch,               # VMEM (1, H) hidden state carried across grid steps
):
    del toks_ref
    H, L, Lp = HIDDEN, MAX_LENGTH, PAD_LENGTH
    s = pl.program_id(0)

    @pl.when(s == 0)
    def _():
        h_scratch[...] = h0_ref[...]

    emb = emb_ref[0]                                   # (1, H)  embedded[0]
    h = h_scratch[...]                                 # (1, H)  carried hidden[0]
    # TODO(synk): dropout runs in eval mode (identity); training-mode dropout would need
    #             pltpu.prng_seed + pltpu.stateful_bernoulli.

    ba = b_ref[0:1, 0:Lp]                              # (1, Lp)
    bc = b_ref[1:2, 0:H]                               # (1, H)
    bih = b_ref[2:3, :]                                # (1, 128) (pads zero)
    bhh = b_ref[3:4, :]                                # (1, 128)
    wo_row = b_ref[4:5, 0:H]                           # (1, H)
    bo = b_ref[5:6, 0:1]                               # (1, 1)

    # One MXU push per operand against the packed [Wa_pad | Wc | 0] slab:
    #   pe lanes 0:Lp    = emb @ Wa[:H]   (attn-logit half, off the hidden-carry path)
    #   pe lanes Lp:Lp+H = emb @ Wc[:H]   (attn_combine half, off the path)
    pe = jnp.dot(emb, wac_ref[0:H, :], preferred_element_type=jnp.float32)       # (1, 128)
    ph = jnp.dot(h, wac_ref[H:2 * H, :], preferred_element_type=jnp.float32)     # (1, 128)

    # attn_weights = softmax(attn(cat(embedded[0], hidden[0], 1)), dim=1)
    logits = pe[:, 0:Lp] + ph[:, 0:Lp] + ba                                      # (1, Lp)
    lane = jax.lax.broadcasted_iota(jnp.int32, (1, Lp), 1)
    logits = jnp.where(lane < L, logits, -1e30)        # mask padded lanes
    logits = logits - jnp.max(logits, axis=1, keepdims=True)
    ex = jnp.exp(logits)
    attnw = ex * pl.reciprocal(jnp.sum(ex, axis=1, keepdims=True), approx=True)  # pads = 0

    # attn_applied = bmm(attn_weights, encoder_outputs)   (padded rows are zero)
    attn_applied = jnp.dot(attnw, enc_ref[...], preferred_element_type=jnp.float32)  # (1, H)

    # output = relu(attn_combine(cat(embedded[0], attn_applied[0], 1)))
    # split concat: emb half reused from pe (off path); applied half is a K=32 dot.
    x = pe[:, Lp:Lp + H] + jnp.dot(attn_applied, wac_ref[H:2 * H, Lp:Lp + H],
                                   preferred_element_type=jnp.float32) + bc
    x = jnp.maximum(x, 0.0)                                                      # (1, H)

    # single-step GRU (PyTorch gate order r, z, n), fused gate matmuls (full 128-lane RHS;
    # zero-padded lanes are free, gates sliced from the result)
    gi = jnp.dot(x, wg_ref[0:H, :], preferred_element_type=jnp.float32) + bih    # (1, 128)
    gh = jnp.dot(h, wg_ref[H:2 * H, :], preferred_element_type=jnp.float32) + bhh
    r = jax.nn.sigmoid(gi[:, 0:H] + gh[:, 0:H])
    z = jax.nn.sigmoid(gi[:, H:2 * H] + gh[:, H:2 * H])
    n = jnp.tanh(gi[:, 2 * H:3 * H] + r * gh[:, 2 * H:3 * H])
    hnew = (1.0 - z) * n + z * h                                                 # (1, H)
    h_scratch[...] = hnew                              # carry to next decode step

    # output = self.out(gru_output[0]) — Wo is (H,1): VPU mul + lane reduce, no MXU push
    out = jnp.sum(hnew * wo_row, axis=1, keepdims=True) + bo                     # (1, 1)

    # lane-dense packed store via direct slice stores (no concat/lane shifts on the tail)
    out_ref[0, :, 0:Lp] = attnw
    out_ref[0, :, Lp:Lp + H] = hnew
    out_ref[0, :, Lp + H:] = jnp.broadcast_to(out, (1, OUT_LANES - Lp - H))


def pack_params(params):
    """Host-side one-time packing of the 11 raw parameter arrays into 4 kernel operands
    (all weight slabs padded to 128 lanes for unmasked vector loads)."""
    H, L, Lp = HIDDEN, MAX_LENGTH, PAD_LENGTH
    wa_pad = jnp.pad(params["Wa"], ((0, 0), (0, Lp - L)))              # (2H, Lp)
    w_ac = jnp.zeros((2 * H, WEIGHT_LANES), jnp.float32)
    w_ac = w_ac.at[:, 0:Lp].set(wa_pad)
    w_ac = w_ac.at[:, Lp:Lp + H].set(params["Wc"])                     # (2H, 128)
    w_g = jnp.zeros((2 * H, WEIGHT_LANES), jnp.float32)
    w_g = w_g.at[:, 0:3 * H].set(
        jnp.concatenate([params["Wih"], params["Whh"]], axis=0))       # (2H, 128)
    b = jnp.zeros((8, WEIGHT_LANES), jnp.float32)
    b = b.at[0, :L].set(params["ba"][0])
    b = b.at[1, :H].set(params["bc"][0])
    b = b.at[2, :3 * H].set(params["bih"][0])
    b = b.at[3, :3 * H].set(params["bhh"][0])
    b = b.at[4, :H].set(params["Wo"][:, 0])
    b = b.at[5, 0].set(params["bo"][0, 0])
    e3 = params["E"].reshape(OUTPUT_SIZE, 1, H)                        # row-gatherable view
    return e3, w_ac, w_g, b


def pad_encoder_outputs(encoder_outputs):
    """Pad (L,H) encoder outputs to (Lp,H) ONCE (loop-invariant across decode steps)."""
    return jnp.pad(encoder_outputs, ((0, PAD_LENGTH - MAX_LENGTH), (0, 0)))


def attn_decoder_steps(tokens, hidden, encoder_outputs_padded, packed):
    """Fused multi-step (teacher-forced) decode: one pallas_call, grid=(T,).
    tokens: (T,) int32; hidden: (1,1,H); encoder_outputs_padded: (Lp,H).
    Returns per-step (out (T,1,1), hidden (T,1,1,H), attn_weights (T,1,L))."""
    H, L, Lp = HIDDEN, MAX_LENGTH, PAD_LENGTH
    e3, w_ac, w_g, b = packed
    tokens = jnp.asarray(tokens, jnp.int32).reshape(-1)
    T = int(tokens.shape[0])
    h0 = hidden.reshape(1, H)

    packed_out = pl.pallas_call(
        attn_decoder_kernel,
        grid_spec=pltpu.PrefetchScalarGridSpec(
            num_scalar_prefetch=1,
            grid=(T,),
            in_specs=[
                pl.BlockSpec((1, 1, H), lambda s, t: (t[s], 0, 0)),        # per-step emb row gather
                pl.BlockSpec((1, H), lambda s, t: (0, 0)),                 # initial hidden (resident)
                pl.BlockSpec((Lp, H), lambda s, t: (0, 0)),                # encoder outputs (resident)
                pl.BlockSpec((2 * H, WEIGHT_LANES), lambda s, t: (0, 0)),  # [Wa|Wc]   (resident)
                pl.BlockSpec((2 * H, WEIGHT_LANES), lambda s, t: (0, 0)),  # [Wih;Whh] (resident)
                pl.BlockSpec((8, WEIGHT_LANES), lambda s, t: (0, 0)),      # biases+Wo+bo (resident)
            ],
            out_specs=pl.BlockSpec((1, 1, OUT_LANES), lambda s, t: (s, 0, 0)),
            scratch_shapes=[pltpu.VMEM((1, H), jnp.float32)],              # carried hidden
        ),
        out_shape=jax.ShapeDtypeStruct((T, 1, OUT_LANES), jnp.float32),
        compiler_params=pltpu.CompilerParams(dimension_semantics=("arbitrary",)),
    )(tokens, e3, h0, encoder_outputs_padded, w_ac, w_g, b)

    attnw = packed_out[:, :, 0:L]                                          # (T, 1, L)
    hid = packed_out[:, :, Lp:Lp + H].reshape(T, 1, 1, H)                  # (T, 1, 1, H)
    out = packed_out[:, :, Lp + H:Lp + H + 1]                              # (T, 1, 1)
    return out, hid, attnw


def attn_decoder_forward(token, hidden, encoder_outputs_padded, packed):
    """Module-equivalent single step (grid=(1,)).  Returns (output (1,1), hidden (1,1,H),
    attn_weights (1,L)) like the PyTorch module's forward."""
    outs, hids, attnws = attn_decoder_steps(
        jnp.reshape(jnp.asarray(token, jnp.int32), (1,)), hidden,
        encoder_outputs_padded, packed)
    return outs[0], hids[0], attnws[0]


def make_params(key):
    ks = jax.random.split(key, 11)
    s = 0.1
    H, L = HIDDEN, MAX_LENGTH
    return {
        "E":   jax.random.normal(ks[0], (OUTPUT_SIZE, H), jnp.float32) * s,   # embedding
        "Wa":  jax.random.normal(ks[1], (2 * H, L), jnp.float32) * s,         # attn.weight.T
        "ba":  jax.random.normal(ks[2], (1, L), jnp.float32) * s,
        "Wc":  jax.random.normal(ks[3], (2 * H, H), jnp.float32) * s,         # attn_combine.weight.T
        "bc":  jax.random.normal(ks[4], (1, H), jnp.float32) * s,
        "Wih": jax.random.normal(ks[5], (H, 3 * H), jnp.float32) * s,         # gru.weight_ih_l0.T (r,z,n)
        "Whh": jax.random.normal(ks[6], (H, 3 * H), jnp.float32) * s,         # gru.weight_hh_l0.T
        "bih": jax.random.normal(ks[7], (1, 3 * H), jnp.float32) * s,
        "bhh": jax.random.normal(ks[8], (1, 3 * H), jnp.float32) * s,
        "Wo":  jax.random.normal(ks[9], (H, 1), jnp.float32) * s,             # out.weight.T
        "bo":  jax.random.normal(ks[10], (1, 1), jnp.float32) * s,
    }


def reference_forward(token, hidden, encoder_outputs, p):
    """Pure-JAX mirror of the PyTorch forward (eval mode) for validation."""
    H = HIDDEN
    emb = p["E"][jnp.asarray(token, jnp.int32)].reshape(1, H)
    h = hidden.reshape(1, H)
    attnw = jax.nn.softmax(jnp.concatenate([emb, h], 1) @ p["Wa"] + p["ba"], axis=1)
    applied = attnw @ encoder_outputs
    x = jax.nn.relu(jnp.concatenate([emb, applied], 1) @ p["Wc"] + p["bc"])
    gi = x @ p["Wih"] + p["bih"]
    gh = h @ p["Whh"] + p["bhh"]
    r = jax.nn.sigmoid(gi[:, :H] + gh[:, :H])
    z = jax.nn.sigmoid(gi[:, H:2 * H] + gh[:, H:2 * H])
    n = jnp.tanh(gi[:, 2 * H:] + r * gh[:, 2 * H:])
    hnew = (1.0 - z) * n + z * h
    out = hnew @ p["Wo"] + p["bo"]
    return out, hnew.reshape(1, 1, HIDDEN), attnw


if __name__ == "__main__":
    key = jax.random.PRNGKey(0)
    kp, kh, ke = jax.random.split(key, 3)

    params = make_params(kp)
    packed = pack_params(params)                  # one-time host-side packing
    hidden0 = jax.random.normal(kh, (1, 1, HIDDEN), jnp.float32) * 0.1
    encoder_outputs = jax.random.normal(ke, (MAX_LENGTH, HIDDEN), jnp.float32) * 0.1
    enc_padded = pad_encoder_outputs(encoder_outputs)   # padded once, reused every step
    tokens = jnp.array([7, 3, 42, 11, 0, 99, 58, 23], dtype=jnp.int32)  # teacher-forced sequence

    # fused multi-step decode (grid=(T,), weights VMEM-resident, hidden carried in scratch)
    outs, hids, attnws = attn_decoder_steps(tokens, hidden0, enc_padded, packed)
    jax.block_until_ready((outs, hids, attnws))

    # step-by-step pure-JAX reference (approx reciprocal in the kernel -> loosened tolerance)
    h_ref = hidden0
    for t in range(int(tokens.shape[0])):
        ro, h_ref, ra = reference_forward(tokens[t], h_ref, encoder_outputs, params)
        assert np.allclose(np.asarray(outs[t]), np.asarray(ro), rtol=1e-3, atol=5e-4)
        assert np.allclose(np.asarray(hids[t]), np.asarray(h_ref), rtol=1e-3, atol=5e-4)
        assert np.allclose(np.asarray(attnws[t]), np.asarray(ra), rtol=1e-3, atol=5e-4)

    # module-equivalent single-step call still works (T=1)
    o1, h1, a1 = attn_decoder_forward(tokens[0], hidden0, enc_padded, packed)
    jax.block_until_ready((o1, h1, a1))
    ro, rh, ra = reference_forward(tokens[0], hidden0, encoder_outputs, params)
    assert np.allclose(np.asarray(o1), np.asarray(ro), rtol=1e-3, atol=5e-4)
    assert np.allclose(np.asarray(h1), np.asarray(rh), rtol=1e-3, atol=5e-4)
    assert np.allclose(np.asarray(a1), np.asarray(ra), rtol=1e-3, atol=5e-4)

    print("KERNEL_OK")
</pallas_src>

<mosaic_0001>
module attributes {stable_mosaic.version = 11 : i64} {
  func.func @attn_decoder_kernel(%arg0: i32, %arg1: memref<8xi32, #tpu.memory_space<smem>>, %arg2: memref<1x1x32xf32, #tpu.memory_space<vmem>>, %arg3: memref<1x32xf32, #tpu.memory_space<vmem>>, %arg4: memref<32x32xf32, #tpu.memory_space<vmem>>, %arg5: memref<64x128xf32, #tpu.memory_space<vmem>>, %arg6: memref<64x128xf32, #tpu.memory_space<vmem>>, %arg7: memref<8x128xf32, #tpu.memory_space<vmem>>, %arg8: memref<1x1x128xf32, #tpu.memory_space<vmem>>, %arg9: memref<1x32xf32, #tpu.memory_space<vmem>>) attributes {dimension_semantics = [#tpu.dimension_semantics<arbitrary>], iteration_bounds = array<i64: 8>, scalar_prefetch = 1 : i64, scratch_operands = 1 : i64, tpu.core_type = #tpu.core_type<tc>, window_params = [{transform_indices = @transform_0, window_bounds = array<i64: 1, 1, 32>}, {pipeline_mode = #tpu.pipeline_mode<synchronous>, transform_indices = @transform_1, window_bounds = array<i64: 1, 32>}, {pipeline_mode = #tpu.pipeline_mode<synchronous>, transform_indices = @transform_2, window_bounds = array<i64: 32, 32>}, {pipeline_mode = #tpu.pipeline_mode<synchronous>, transform_indices = @transform_3, window_bounds = array<i64: 64, 128>}, {pipeline_mode = #tpu.pipeline_mode<synchronous>, transform_indices = @transform_4, window_bounds = array<i64: 64, 128>}, {pipeline_mode = #tpu.pipeline_mode<synchronous>, transform_indices = @transform_5, window_bounds = array<i64: 8, 128>}, {transform_indices = @transform_6, window_bounds = array<i64: 1, 1, 128>}]} {
    %c0_i32 = arith.constant 0 : i32
    %0 = arith.cmpi eq, %arg0, %c0_i32 : i32
    %1 = arith.extui %0 : i1 to i32
    %c0_i32_0 = arith.constant 0 : i32
    %2 = arith.cmpi ne, %1, %c0_i32_0 : i32
    scf.if %2 {
      %c0_46 = arith.constant 0 : index
      %c0_47 = arith.constant 0 : index
      %92 = vector.load %arg3[%c0_46, %c0_47] : memref<1x32xf32, #tpu.memory_space<vmem>>, vector<1x32xf32>
      %c0_48 = arith.constant 0 : index
      %c0_49 = arith.constant 0 : index
      %93 = vector.load %arg9[%c0_48, %c0_49] : memref<1x32xf32, #tpu.memory_space<vmem>>, vector<1x32xf32>
      tpu.vector_store %arg9[%c0_48, %c0_49], %92 {strides = array<i32>} : memref<1x32xf32, #tpu.memory_space<vmem>>, vector<1x32xf32>,
    } else {
    }
    %c0 = arith.constant 0 : index
    %c0_1 = arith.constant 0 : index
    %c0_2 = arith.constant 0 : index
    %3 = vector.load %arg2[%c0, %c0_1, %c0_2] : memref<1x1x32xf32, #tpu.memory_space<vmem>>, vector<1x1x32xf32>
    %4 = vector.shape_cast %3 : vector<1x1x32xf32> to vector<1x32xf32>
    %c0_3 = arith.constant 0 : index
    %c0_4 = arith.constant 0 : index
    %5 = vector.load %arg9[%c0_3, %c0_4] : memref<1x32xf32, #tpu.memory_space<vmem>>, vector<1x32xf32>
    %c0_5 = arith.constant 0 : index
    %c0_6 = arith.constant 0 : index
    %6 = vector.load %arg7[%c0_5, %c0_6] : memref<8x128xf32, #tpu.memory_space<vmem>>, vector<1x32xf32>
    %c1 = arith.constant 1 : index
    %c0_7 = arith.constant 0 : index
    %7 = vector.load %arg7[%c1, %c0_7] : memref<8x128xf32, #tpu.memory_space<vmem>>, vector<1x32xf32>
    %c2 = arith.constant 2 : index
    %c0_8 = arith.constant 0 : index
    %8 = vector.load %arg7[%c2, %c0_8] : memref<8x128xf32, #tpu.memory_space<vmem>>, vector<1x128xf32>
    %c3 = arith.constant 3 : index
    %c0_9 = arith.constant 0 : index
    %9 = vector.load %arg7[%c3, %c0_9] : memref<8x128xf32, #tpu.memory_space<vmem>>, vector<1x128xf32>
    %c4 = arith.constant 4 : index
    %c0_10 = arith.constant 0 : index
    %10 = vector.load %arg7[%c4, %c0_10] : memref<8x128xf32, #tpu.memory_space<vmem>>, vector<1x32xf32>
    %c5 = arith.constant 5 : index
    %c0_11 = arith.constant 0 : index
    %11 = vector.load %arg7[%c5, %c0_11] : memref<8x128xf32, #tpu.memory_space<vmem>>, vector<1x1xf32>
    %c0_12 = arith.constant 0 : index
    %c0_13 = arith.constant 0 : index
    %12 = vector.load %arg5[%c0_12, %c0_13] : memref<64x128xf32, #tpu.memory_space<vmem>>, vector<32x128xf32>
    %cst = arith.constant dense<0.000000e+00> : vector<1x128xf32>
    %13 = tpu.matmul %4, %12, %cst {dimension_numbers = #tpu.dot_dimension_numbers<[1], [0], [0], [1], [0, 0, 1, 1], [], []>} : vector<1x32xf32>, vector<32x128xf32>, vector<1x128xf32> -> vector<1x128xf32>
    %c32 = arith.constant 32 : index
    %c0_14 = arith.constant 0 : index
    %14 = vector.load %arg5[%c32, %c0_14] : memref<64x128xf32, #tpu.memory_space<vmem>>, vector<32x128xf32>
    %cst_15 = arith.constant dense<0.000000e+00> : vector<1x128xf32>
    %15 = tpu.matmul %5, %14, %cst_15 {dimension_numbers = #tpu.dot_dimension_numbers<[1], [0], [0], [1], [0, 0, 1, 1], [], []>} : vector<1x32xf32>, vector<32x128xf32>, vector<1x128xf32> -> vector<1x128xf32>
    %16 = vector.extract_strided_slice %13 {offsets = [0, 0], sizes = [1, 32], strides = [1, 1]} : vector<1x128xf32> to vector<1x32xf32>
    %17 = vector.extract_strided_slice %15 {offsets = [0, 0], sizes = [1, 32], strides = [1, 1]} : vector<1x128xf32> to vector<1x32xf32>
    %18 = arith.addf %16, %17 : vector<1x32xf32>
    %19 = arith.addf %18, %6 : vector<1x32xf32>
    %20 = tpu.iota {dimensions = array<i32: 1>} : vector<1x32xi32>
    %c25_i32 = arith.constant 25 : i32
    %21 = vector.broadcast %c25_i32 : i32 to vector<1x32xi32>
    %22 = arith.cmpi slt, %20, %21 : vector<1x32xi32>
    %cst_16 = arith.constant -1.000000e+30 : f32
    %23 = vector.broadcast %cst_16 : f32 to vector<1x32xf32>
    %24 = arith.select %22, %19, %23 : vector<1x32xi1>, vector<1x32xf32>
    %cst_17 = arith.constant dense<0xFF800000> : vector<1xf32>
    %25 = vector.multi_reduction <maximumf>, %24, %cst_17 [1] : vector<1x32xf32> to vector<1xf32>
    %26 = vector.shape_cast %25 : vector<1xf32> to vector<1x1xf32>
    %27 = vector.broadcast %26 : vector<1x1xf32> to vector<1x32xf32>
    %28 = arith.subf %24, %27 : vector<1x32xf32>
    %29 = math.exp %28 : vector<1x32xf32>
    %cst_18 = arith.constant dense<0.000000e+00> : vector<1xf32>
    %30 = vector.multi_reduction <add>, %29, %cst_18 [1] : vector<1x32xf32> to vector<1xf32>
    %31 = vector.shape_cast %30 : vector<1xf32> to vector<1x1xf32>
    %32 = tpu.reciprocal %31 {approx = true} : vector<1x1xf32> -> vector<1x1xf32>
    %33 = vector.broadcast %32 : vector<1x1xf32> to vector<1x32xf32>
    %34 = arith.mulf %29, %33 : vector<1x32xf32>
    %c0_19 = arith.constant 0 : index
    %c0_20 = arith.constant 0 : index
    %35 = vector.load %arg4[%c0_19, %c0_20] : memref<32x32xf32, #tpu.memory_space<vmem>>, vector<32x32xf32>
    %cst_21 = arith.constant dense<0.000000e+00> : vector<1x32xf32>
    %36 = tpu.matmul %34, %35, %cst_21 {dimension_numbers = #tpu.dot_dimension_numbers<[1], [0], [0], [1], [0, 0, 1, 1], [], []>} : vector<1x32xf32>, vector<32x32xf32>, vector<1x32xf32> -> vector<1x32xf32>
    %37 = vector.extract_strided_slice %13 {offsets = [0, 32], sizes = [1, 32], strides = [1, 1]} : vector<1x128xf32> to vector<1x32xf32>
    %c32_22 = arith.constant 32 : index
    %c32_23 = arith.constant 32 : index
    %38 = vector.load %arg5[%c32_22, %c32_23] : memref<64x128xf32, #tpu.memory_space<vmem>>, vector<32x32xf32>
    %cst_24 = arith.constant dense<0.000000e+00> : vector<1x32xf32>
    %39 = tpu.matmul %36, %38, %cst_24 {dimension_numbers = #tpu.dot_dimension_numbers<[1], [0], [0], [1], [0, 0, 1, 1], [], []>} : vector<1x32xf32>, vector<32x32xf32>, vector<1x32xf32> -> vector<1x32xf32>
    %40 = arith.addf %37, %39 : vector<1x32xf32>
    %41 = arith.addf %40, %7 : vector<1x32xf32>
    %cst_25 = arith.constant 0.000000e+00 : f32
    %42 = vector.broadcast %cst_25 : f32 to vector<1x32xf32>
    %43 = arith.maximumf %41, %42 : vector<1x32xf32>
    %c0_26 = arith.constant 0 : index
    %c0_27 = arith.constant 0 : index
    %44 = vector.load %arg6[%c0_26, %c0_27] : memref<64x128xf32, #tpu.memory_space<vmem>>, vector<32x128xf32>
    %cst_28 = arith.constant dense<0.000000e+00> : vector<1x128xf32>
    %45 = tpu.matmul %43, %44, %cst_28 {dimension_numbers = #tpu.dot_dimension_numbers<[1], [0], [0], [1], [0, 0, 1, 1], [], []>} : vector<1x32xf32>, vector<32x128xf32>, vector<1x128xf32> -> vector<1x128xf32>
    %46 = arith.addf %45, %8 : vector<1x128xf32>
    %c32_29 = arith.constant 32 : index
    %c0_30 = arith.constant 0 : index
    %47 = vector.load %arg6[%c32_29, %c0_30] : memref<64x128xf32, #tpu.memory_space<vmem>>, vector<32x128xf32>
    %cst_31 = arith.constant dense<0.000000e+00> : vector<1x128xf32>
    %48 = tpu.matmul %5, %47, %cst_31 {dimension_numbers = #tpu.dot_dimension_numbers<[1], [0], [0], [1], [0, 0, 1, 1], [], []>} : vector<1x32xf32>, vector<32x128xf32>, vector<1x128xf32> -> vector<1x128xf32>
    %49 = arith.addf %48, %9 : vector<1x128xf32>
    %50 = vector.extract_strided_slice %46 {offsets = [0, 0], sizes = [1, 32], strides = [1, 1]} : vector<1x128xf32> to vector<1x32xf32>
    %51 = vector.extract_strided_slice %49 {offsets = [0, 0], sizes = [1, 32], strides = [1, 1]} : vector<1x128xf32> to vector<1x32xf32>
    %52 = arith.addf %50, %51 : vector<1x32xf32>
    %53 = arith.negf %52 : vector<1x32xf32>
    %54 = math.exp %53 : vector<1x32xf32>
    %cst_32 = arith.constant 1.000000e+00 : f32
    %55 = vector.broadcast %cst_32 : f32 to vector<1x32xf32>
    %56 = arith.addf %55, %54 : vector<1x32xf32>
    %57 = arith.divf %55, %56 : vector<1x32xf32>
    %58 = vector.extract_strided_slice %46 {offsets = [0, 32], sizes = [1, 32], strides = [1, 1]} : vector<1x128xf32> to vector<1x32xf32>
    %59 = vector.extract_strided_slice %49 {offsets = [0, 32], sizes = [1, 32], strides = [1, 1]} : vector<1x128xf32> to vector<1x32xf32>
    %60 = arith.addf %58, %59 : vector<1x32xf32>
    %61 = arith.negf %60 : vector<1x32xf32>
    %62 = math.exp %61 : vector<1x32xf32>
    %cst_33 = arith.constant 1.000000e+00 : f32
    %63 = vector.broadcast %cst_33 : f32 to vector<1x32xf32>
    %64 = arith.addf %63, %62 : vector<1x32xf32>
    %65 = arith.divf %63, %64 : vector<1x32xf32>
    %66 = vector.extract_strided_slice %46 {offsets = [0, 64], sizes = [1, 32], strides = [1, 1]} : vector<1x128xf32> to vector<1x32xf32>
    %67 = vector.extract_strided_slice %49 {offsets = [0, 64], sizes = [1, 32], strides = [1, 1]} : vector<1x128xf32> to vector<1x32xf32>
    %68 = arith.mulf %57, %67 : vector<1x32xf32>
    %69 = arith.addf %66, %68 : vector<1x32xf32>
    %70 = math.tanh %69 : vector<1x32xf32>
    %cst_34 = arith.constant 1.000000e+00 : f32
    %71 = vector.broadcast %cst_34 : f32 to vector<1x32xf32>
    %72 = arith.subf %71, %65 : vector<1x32xf32>
    %73 = arith.mulf %72, %70 : vector<1x32xf32>
    %74 = arith.mulf %65, %5 : vector<1x32xf32>
    %75 = arith.addf %73, %74 : vector<1x32xf32>
    %c0_35 = arith.constant 0 : index
    %c0_36 = arith.constant 0 : index
    %76 = vector.load %arg9[%c0_35, %c0_36] : memref<1x32xf32, #tpu.memory_space<vmem>>, vector<1x32xf32>
    tpu.vector_store %arg9[%c0_35, %c0_36], %75 {strides = array<i32>} : memref<1x32xf32, #tpu.memory_space<vmem>>, vector<1x32xf32>,
    %77 = arith.mulf %75, %10 : vector<1x32xf32>
    %cst_37 = arith.constant dense<0.000000e+00> : vector<1xf32>
    %78 = vector.multi_reduction <add>, %77, %cst_37 [1] : vector<1x32xf32> to vector<1xf32>
    %79 = vector.shape_cast %78 : vector<1xf32> to vector<1x1xf32>
    %80 = arith.addf %79, %11 : vector<1x1xf32>
    %c0_38 = arith.constant 0 : index
    %c0_39 = arith.constant 0 : index
    %c0_40 = arith.constant 0 : index
    %81 = vector.load %arg8[%c0_38, %c0_39, %c0_40] : memref<1x1x128xf32, #tpu.memory_space<vmem>>, vector<1x1x32xf32>
    %82 = vector.shape_cast %81 : vector<1x1x32xf32> to vector<1x32xf32>
    %83 = vector.shape_cast %34 : vector<1x32xf32> to vector<1x1x32xf32>
    tpu.vector_store %arg8[%c0_38, %c0_39, %c0_40], %83 {strides = array<i32>} : memref<1x1x128xf32, #tpu.memory_space<vmem>>, vector<1x1x32xf32>,
    %c0_41 = arith.constant 0 : index
    %c0_42 = arith.constant 0 : index
    %c32_43 = arith.constant 32 : index
    %84 = vector.load %arg8[%c0_41, %c0_42, %c32_43] : memref<1x1x128xf32, #tpu.memory_space<vmem>>, vector<1x1x32xf32>
    %85 = vector.shape_cast %84 : vector<1x1x32xf32> to vector<1x32xf32>
    %86 = vector.shape_cast %75 : vector<1x32xf32> to vector<1x1x32xf32>
    tpu.vector_store %arg8[%c0_41, %c0_42, %c32_43], %86 {strides = array<i32>} : memref<1x1x128xf32, #tpu.memory_space<vmem>>, vector<1x1x32xf32>,
    %87 = vector.shape_cast %80 : vector<1x1xf32> to vector<1x1xf32>
    %88 = vector.broadcast %87 : vector<1x1xf32> to vector<1x64xf32>
    %c0_44 = arith.constant 0 : index
    %c0_45 = arith.constant 0 : index
    %c64 = arith.constant 64 : index
    %89 = vector.load %arg8[%c0_44, %c0_45, %c64] : memref<1x1x128xf32, #tpu.memory_space<vmem>>, vector<1x1x64xf32>
    %90 = vector.shape_cast %89 : vector<1x1x64xf32> to vector<1x64xf32>
    %91 = vector.shape_cast %88 : vector<1x64xf32> to vector<1x1x64xf32>
    tpu.vector_store %arg8[%c0_44, %c0_45, %c64], %91 {strides = array<i32>} : memref<1x1x128xf32, #tpu.memory_space<vmem>>, vector<1x1x64xf32>,
    return
  }
  func.func @transform_0(%arg0: i32, %arg1: memref<8xi32, #tpu.memory_space<smem>>) -> (i32, i32, i32) {
    %0 = arith.index_cast %arg0 : i32 to index
    %1 = memref.load %arg1[%0] : memref<8xi32, #tpu.memory_space<smem>>
    %c0_i32 = arith.constant 0 : i32
    %c0_i32_0 = arith.constant 0 : i32
    %c0_i32_1 = arith.constant 0 : i32
    return %1, %c0_i32, %c0_i32_0 : i32, i32, i32
  }
  func.func @transform_1(%arg0: i32, %arg1: memref<8xi32, #tpu.memory_space<smem>>) -> (i32, i32) {
    %c0_i32 = arith.constant 0 : i32
    %c0_i32_0 = arith.constant 0 : i32
    %c0_i32_1 = arith.constant 0 : i32
    return %c0_i32, %c0_i32_0 : i32, i32
  }
  func.func @transform_2(%arg0: i32, %arg1: memref<8xi32, #tpu.memory_space<smem>>) -> (i32, i32) {
    %c0_i32 = arith.constant 0 : i32
    %c0_i32_0 = arith.constant 0 : i32
    %c0_i32_1 = arith.constant 0 : i32
    return %c0_i32, %c0_i32_0 : i32, i32
  }
  func.func @transform_3(%arg0: i32, %arg1: memref<8xi32, #tpu.memory_space<smem>>) -> (i32, i32) {
    %c0_i32 = arith.constant 0 : i32
    %c0_i32_0 = arith.constant 0 : i32
    %c0_i32_1 = arith.constant 0 : i32
    return %c0_i32, %c0_i32_0 : i32, i32
  }
  func.func @transform_4(%arg0: i32, %arg1: memref<8xi32, #tpu.memory_space<smem>>) -> (i32, i32) {
    %c0_i32 = arith.constant 0 : i32
    %c0_i32_0 = arith.constant 0 : i32
    %c0_i32_1 = arith.constant 0 : i32
    return %c0_i32, %c0_i32_0 : i32, i32
  }
  func.func @transform_5(%arg0: i32, %arg1: memref<8xi32, #tpu.memory_space<smem>>) -> (i32, i32) {
    %c0_i32 = arith.constant 0 : i32
    %c0_i32_0 = arith.constant 0 : i32
    %c0_i32_1 = arith.constant 0 : i32
    return %c0_i32, %c0_i32_0 : i32, i32
  }
  func.func @transform_6(%arg0: i32, %arg1: memref<8xi32, #tpu.memory_space<smem>>) -> (i32, i32, i32) {
    %c0_i32 = arith.constant 0 : i32
    %c0_i32_0 = arith.constant 0 : i32
    %c0_i32_1 = arith.constant 0 : i32
    return %arg0, %c0_i32, %c0_i32_0 : i32, i32, i32
  }
}

</mosaic_0001>

<llo_original>
// kernel: tpu_custom_call.1
$region0: #{tpu_custom_call.1}
  #allocation0 [shape = 'u32[]', space=smem, size = 0x4, offset = 0x4, fixed_abs, tag = 'smem constant byte address 0x4 - core index']
  #allocation1 [shape = 'u32[144,128]{1,0:T(1,128)}', space=vmem, size = 0x12000, scoped, tag = 'internal scratch']
  #allocation2 [shape = 'f32[1,32]{1,0:T(1,128)}', space=vmem, size = 0x200, scoped, tag = 'scratch operand']
  #allocation3 [shape = 's32[1]{0}', space=sflag, size = 0x4, scoped, tag = 'scoped memory for tpu_custom_call.1']
  #allocation4 [shape = 'u8[512]{0}', space=smem, size = 0x200, scoped, tag = 'prefetched SMEM operand 0']
  %s0 = inlined_call_operand.vmem [shape: s32[8], index: 0, kind: input, shape index: {}]
  %s1 = inlined_call_operand.vmem [shape: f32[100,1,32], index: 1, kind: input, shape index: {}]
  %s2 = inlined_call_operand.vmem [shape: f32[1,32], index: 2, kind: input, shape index: {}]
  %s3 = inlined_call_operand.hbm [shape: f32[32,32], index: 3, kind: input, shape index: {}]
  %s4 = inlined_call_operand.vmem [shape: f32[64,128], index: 4, kind: input, shape index: {}]
  %s5 = inlined_call_operand.vmem [shape: f32[64,128], index: 5, kind: input, shape index: {}]
  %s6 = inlined_call_operand.vmem [shape: f32[8,128], index: 6, kind: input, shape index: {}]
  %s7 = inlined_call_operand.hbm [shape: f32[8,1,128], index: 7, kind: output, shape index: {}]
  %s8 = sld [smem:[#allocation0]]
  $region65: #{tpu_custom_call.1} parent=0
    _
  %s10 = ssub.s32 1, %s8
  %s11 = scalar_select 0, %s10, %s8
  %s12 = sshll.u32 %s0, 4
  %s13 = int_to_ptr.vmem [resolvable:$true] %s12
  %15 = dma.vmem_to_smem %s13, 16, [#allocation4], [#allocation3]
  %16 = dma.done [#allocation3], 16
  %17 = sfence
  $region1: #{tpu_custom_call.1} parent=0
    #allocation5 [shape = 'u8[16384]{0}', space=vmem, size = 0x4000, scoped, tag = 'input window, operand 3, single buffered']
    #allocation6 [shape = 's32[2]{0}', space=sflag, size = 0x8, scoped, tag = 'scoped memory for tpu_custom_call.1']
    #allocation7 [shape = 's32[2]{0}', space=sflag, size = 0x8, scoped, tag = 'scoped memory for tpu_custom_call.1']
    #allocation8 [shape = 'u8[1024]{0}', space=vmem, size = 0x400, scoped, tag = 'output window, operand 0']
    %18 = vsyncpa [#allocation6], 0
    %19 = vsyncpa [#allocation7], 0
    %s20 = scalar_lea.sflag [#allocation7], 1
    %21 = vsyncpa %s20, 0
    loop: start=0, step=1, limit=10
    $region2: #{tpu_custom_call.1} parent=1 // loop_pre_header
      _
    $region3: #{tpu_custom_call.1} parent=1 // loop_header
      %s23 = sphi 0, %s27
      %p24 = scmp.ge.s32.totalorder %s23, 10
      %s35 = sphi 0, %s37
      %s38 = sphi 0, %s35
      %s39 = sphi 0, %s38
      %s55 = sphi 0, %s39
      %s59 = sphi 0, %s59
      %s61 = sphi 0, %s59
      %s62 = sphi 0, %s61
      %s76 = sphi 0, %s62
      %s80 = sphi 0, %s80
      %s82 = sphi 0, %s80
      %s83 = sphi 0, %s82
      %s97 = sphi 0, %s83
      %s101 = sphi 0, %s101
      %s103 = sphi 0, %s101
      %s104 = sphi 0, %s103
      %s118 = sphi 0, %s104
      %s122 = sphi 0, %s122
      %s124 = sphi 0, %s122
      %s125 = sphi 0, %s124
      %s139 = sphi 0, %s125
      %s143 = sphi 0, %s143
      %s145 = sphi 0, %s143
      %s146 = sphi 0, %s145
      %s160 = sphi 0, %s146
      %s166 = sphi 0, %s168
      %s169 = sphi 0, %s166
      %s170 = sphi 0, %s169
      %s186 = sphi 0, %s170
    $region4: #{tpu_custom_call.1} parent=1 // loop_header_branch
      %26 = sbr.rel (%p24) target = $region8
    $region5: #{tpu_custom_call.1} parent=1 // loop_body
      %s28 = ssub.s32 %s23, 1
      %s29 = ssub.s32 %s23, 2
      %s30 = sadd.s32 %s23, 1
      %s31 = sld [smem:[#allocation4 + %s23]]
      %s32 = sld [smem:[#allocation4 + %s30]]
      %s33 = ssub.s32 %s31, %s32
      %p34 = scmp.eq.s32.totalorder %s33, 0
      %s36 = sadd.s32 %s35, 1
      %s37 = scalar_select %p34, %s35, %s36
      %p40 = pneg %p34
      %p41 = scmp.eq.s32.totalorder %s23, 7
      %p42 = por %p40, %p41
      %p43 = scmp.ne.s32.totalorder %s35, %s38
      %p44 = scmp.eq.s32.totalorder %s23, 0
      %p45 = por %p43, %p44
      %p46 = scmp.ne.s32.totalorder %s35, %s38
      %p47 = scmp.eq.s32.totalorder %s28, 7
      %p48 = por %p46, %p47
      %p49 = scmp.ne.s32.totalorder %s38, %s39
      %p50 = scmp.eq.s32.totalorder %s28, 0
      %p51 = por %p49, %p50
      %p52 = scmp.ne.s32.totalorder %s38, %s39
      %p53 = scmp.eq.s32.totalorder %s29, 7
      %p54 = por %p52, %p53
      %p56 = scmp.ne.s32.totalorder %s39, %s55
      %p57 = scmp.eq.s32.totalorder %s29, 0
      %p58 = por %p56, %p57
      %s60 = sadd.s32 %s59, 1
      %p63 = scmp.eq.s32.totalorder %s23, 7
      %p64 = scmp.ne.s32.totalorder %s59, %s61
      %p65 = scmp.eq.s32.totalorder %s23, 0
      %p66 = por %p64, %p65
      %p67 = scmp.ne.s32.totalorder %s59, %s61
      %p68 = scmp.eq.s32.totalorder %s28, 7
      %p69 = por %p67, %p68
      %p70 = scmp.ne.s32.totalorder %s61, %s62
      %p71 = scmp.eq.s32.totalorder %s28, 0
      %p72 = por %p70, %p71
      %p73 = scmp.ne.s32.totalorder %s61, %s62
      %p74 = scmp.eq.s32.totalorder %s29, 7
      %p75 = por %p73, %p74
      %p77 = scmp.ne.s32.totalorder %s62, %s76
      %p78 = scmp.eq.s32.totalorder %s29, 0
      %p79 = por %p77, %p78
      %s81 = sadd.s32 %s80, 1
      %p84 = scmp.eq.s32.totalorder %s23, 7
      %p85 = scmp.ne.s32.totalorder %s80, %s82
      %p86 = scmp.eq.s32.totalorder %s23, 0
      %p87 = por %p85, %p86
      %p88 = scmp.ne.s32.totalorder %s80, %s82
      %p89 = scmp.eq.s32.totalorder %s28, 7
      %p90 = por %p88, %p89
      %p91 = scmp.ne.s32.totalorder %s82, %s83
      %p92 = scmp.eq.s32.totalorder %s28, 0
      %p93 = por %p91, %p92
      %p94 = scmp.ne.s32.totalorder %s82, %s83
      %p95 = scmp.eq.s32.totalorder %s29, 7
      %p96 = por %p94, %p95
      %p98 = scmp.ne.s32.totalorder %s83, %s97
      %p99 = scmp.eq.s32.totalorder %s29, 0
      %p100 = por %p98, %p99
      %s102 = sadd.s32 %s101, 1
      %p105 = scmp.eq.s32.totalorder %s23, 7
      %p106 = scmp.ne.s32.totalorder %s101, %s103
      %p107 = scmp.eq.s32.totalorder %s23, 0
      %p108 = por %p106, %p107
      %p109 = scmp.ne.s32.totalorder %s101, %s103
      %p110 = scmp.eq.s32.totalorder %s28, 7
      %p111 = por %p109, %p110
      %p112 = scmp.ne.s32.totalorder %s103, %s104
      %p113 = scmp.eq.s32.totalorder %s28, 0
      %p114 = por %p112, %p113
      %p115 = scmp.ne.s32.totalorder %s103, %s104
      %p116 = scmp.eq.s32.totalorder %s29, 7
      %p117 = por %p115, %p116
      %p119 = scmp.ne.s32.totalorder %s104, %s118
      %p120 = scmp.eq.s32.totalorder %s29, 0
      %p121 = por %p119, %p120
      %s123 = sadd.s32 %s122, 1
      %p126 = scmp.eq.s32.totalorder %s23, 7
      %p127 = scmp.ne.s32.totalorder %s122, %s124
      %p128 = scmp.eq.s32.totalorder %s23, 0
      %p129 = por %p127, %p128
      %p130 = scmp.ne.s32.totalorder %s122, %s124
      %p131 = scmp.eq.s32.totalorder %s28, 7
      %p132 = por %p130, %p131
      %p133 = scmp.ne.s32.totalorder %s124, %s125
      %p134 = scmp.eq.s32.totalorder %s28, 0
      %p135 = por %p133, %p134
      %p136 = scmp.ne.s32.totalorder %s124, %s125
      %p137 = scmp.eq.s32.totalorder %s29, 7
      %p138 = por %p136, %p137
      %p140 = scmp.ne.s32.totalorder %s125, %s139
      %p141 = scmp.eq.s32.totalorder %s29, 0
      %p142 = por %p140, %p141
      %s144 = sadd.s32 %s143, 1
      %p147 = scmp.eq.s32.totalorder %s23, 7
      %p148 = scmp.ne.s32.totalorder %s143, %s145
      %p149 = scmp.eq.s32.totalorder %s23, 0
      %p150 = por %p148, %p149
      %p151 = scmp.ne.s32.totalorder %s143, %s145
      %p152 = scmp.eq.s32.totalorder %s28, 7
      %p153 = por %p151, %p152
      %p154 = scmp.ne.s32.totalorder %s145, %s146
      %p155 = scmp.eq.s32.totalorder %s28, 0
      %p156 = por %p154, %p155
      %p157 = scmp.ne.s32.totalorder %s145, %s146
      %p158 = scmp.eq.s32.totalorder %s29, 7
      %p159 = por %p157, %p158
      %p161 = scmp.ne.s32.totalorder %s146, %s160
      %p162 = scmp.eq.s32.totalorder %s29, 0
      %p163 = por %p161, %p162
      %s164 = ssub.s32 %s23, %s30
      %p165 = scmp.eq.s32.totalorder %s164, 0
      %s167 = sadd.s32 %s166, 1
      %s168 = scalar_select %p165, %s166, %s167
      %p171 = pneg %p165
      %p172 = scmp.eq.s32.totalorder %s23, 7
      %p173 = por %p171, %p172
      %p174 = scmp.ne.s32.totalorder %s166, %s169
      %p175 = scmp.eq.s32.totalorder %s23, 0
      %p176 = por %p174, %p175
      %p177 = scmp.ne.s32.totalorder %s166, %s169
      %p178 = scmp.eq.s32.totalorder %s28, 7
      %p179 = por %p177, %p178
      %p180 = scmp.ne.s32.totalorder %s169, %s170
      %p181 = scmp.eq.s32.totalorder %s28, 0
      %p182 = por %p180, %p181
      %p183 = scmp.ne.s32.totalorder %s169, %s170
      %p184 = scmp.eq.s32.totalorder %s29, 7
      %p185 = por %p183, %p184
      %p187 = scmp.ne.s32.totalorder %s170, %s186
      %p188 = scmp.eq.s32.totalorder %s29, 0
      %p189 = por %p187, %p188
      %p190 = scmp.le.s32.totalorder 1, %s23
      %p191 = scmp.lt.s32.totalorder %s23, 9
      %p192 = pnand %p190, %p191
      %p193 = pneg %p192
      // Predicated region
      $region9: #{tpu_custom_call.1} parent=5 // pred_check
        _
      $region10: #{tpu_custom_call.1} parent=5 // pred_check_branch
        %195 = sbr.rel (%p192) target = $region12
      $region11: #{tpu_custom_call.1} parent=5 // pred_region
        %s196 = ssub.s32 %s23, 1
        // Predicated region
        $region13: #{tpu_custom_call.1} parent=11 // pred_check
          %p197 = pneg %p72
        $region14: #{tpu_custom_call.1} parent=11 // pred_check_branch
          %199 = sbr.rel (%p197) target = $region16
        $region15: #{tpu_custom_call.1} parent=11 // pred_region
          _
        $region16: #{tpu_custom_call.1} parent=11 // pred_fallthru
          _
        // Predicated region
        $region17: #{tpu_custom_call.1} parent=11 // pred_check
          %p200 = pneg %p93
        $region18: #{tpu_custom_call.1} parent=11 // pred_check_branch
          %202 = sbr.rel (%p200) target = $region20
        $region19: #{tpu_custom_call.1} parent=11 // pred_region
          %s204 = ssub.s32 512, 512
          %205 = vsyncadd [#allocation6], %s204
          %s206 = sshll.u32 [#allocation5], 4
          %s207 = int_to_ptr.vmem [resolvable:$true] %s206
          %212 = dma.hbm_to_vmem [thread:$0]  %s3, 512, %s207, [#allocation6], 128, 128, 8
        $region20: #{tpu_custom_call.1} parent=11 // pred_fallthru
          _
        // Predicated region
        $region21: #{tpu_custom_call.1} parent=11 // pred_check
          %p213 = pneg %p114
        $region22: #{tpu_custom_call.1} parent=11 // pred_check_branch
          %215 = sbr.rel (%p213) target = $region24
        $region23: #{tpu_custom_call.1} parent=11 // pred_region
          _
        $region24: #{tpu_custom_call.1} parent=11 // pred_fallthru
          _
        // Predicated region
        $region25: #{tpu_custom_call.1} parent=11 // pred_check
          %p216 = pneg %p135
        $region26: #{tpu_custom_call.1} parent=11 // pred_check_branch
          %218 = sbr.rel (%p216) target = $region28
        $region27: #{tpu_custom_call.1} parent=11 // pred_region
          _
        $region28: #{tpu_custom_call.1} parent=11 // pred_fallthru
          _
        // Predicated region
        $region29: #{tpu_custom_call.1} parent=11 // pred_check
          %p219 = pneg %p156
        $region30: #{tpu_custom_call.1} parent=11 // pred_check_branch
          %221 = sbr.rel (%p219) target = $region32
        $region31: #{tpu_custom_call.1} parent=11 // pred_region
          _
        $region32: #{tpu_custom_call.1} parent=11 // pred_fallthru
          _
      $region12: #{tpu_custom_call.1} parent=5 // pred_fallthru
        _
      %p222 = scmp.lt.s32.totalorder %s23, 8
      // Predicated region
      $region33: #{tpu_custom_call.1} parent=5 // pred_check
        %p223 = pneg %p222
      $region34: #{tpu_custom_call.1} parent=5 // pred_check_branch
        %225 = sbr.rel (%p223) target = $region36
      $region35: #{tpu_custom_call.1} parent=5 // pred_region
        // Predicated region
        $region37: #{tpu_custom_call.1} parent=35 // pred_check
          %p226 = pneg %p45
        $region38: #{tpu_custom_call.1} parent=35 // pred_check_branch
          %228 = sbr.rel (%p226) target = $region40
        $region39: #{tpu_custom_call.1} parent=35 // pred_region
          %s229 = sld [smem:[#allocation4 + %s23]]
          %p230 = scmp.lt.s32.totalorder %s229, 99
          %s231 = scalar_select %p230, %s229, 99
          %s232 = scalar_lea.vmem %s1, %s231
          %s233 = sld [smem:[#allocation4 + %s23]]
        $region40: #{tpu_custom_call.1} parent=35 // pred_fallthru
          _
      $region36: #{tpu_custom_call.1} parent=5 // pred_fallthru
        _
      %p234 = scmp.le.s32.totalorder 1, %s23
      %p235 = scmp.lt.s32.totalorder %s23, 9
      %p236 = pnand %p234, %p235
      %p237 = pneg %p236
      // Predicated region
      $region41: #{tpu_custom_call.1} parent=5 // pred_check
        _
      $region42: #{tpu_custom_call.1} parent=5 // pred_check_branch
        %239 = sbr.rel (%p236) target = $region44
      $region43: #{tpu_custom_call.1} parent=5 // pred_region
        %s240 = ssub.s32 %s23, 1
        // Predicated region
        $region45: #{tpu_custom_call.1} parent=43 // pred_check
          %p241 = pneg %p93
        $region46: #{tpu_custom_call.1} parent=43 // pred_check_branch
          %243 = sbr.rel (%p241) target = $region48
        $region47: #{tpu_custom_call.1} parent=43 // pred_region
          %244 = dma.done [#allocation6], 512
        $region48: #{tpu_custom_call.1} parent=43 // pred_fallthru
          _
        %s245 = sld [smem:[#allocation4 + %s28]]
        %p246 = scmp.lt.s32.totalorder %s245, 99
        %s247 = scalar_select %p246, %s245, 99
        %s248 = scalar_lea.vmem %s1, %s247
        %p249 = pneg %p51
        %p250 = pneg %p48
        %p251 = pneg %p72
        %p252 = pneg %p69
        %p253 = pneg %p93
        %p254 = pneg %p90
        %p255 = pneg %p114
        %p256 = pneg %p111
        %p257 = pneg %p135
        %p258 = pneg %p132
        %p259 = pneg %p156
        %p260 = pneg %p153
        %p261 = pneg %p182
        %p262 = pneg %p179
        %s263 = sand.u32 %s169, 1
        %s264 = scalar_lea.sflag [#allocation7], %s263
        %s265 = sand.u32 %s169, 1
        %s266 = scalar_lea.vmem [#allocation8], %s265
        %s267 = sld [smem:[#allocation4 + %s28]]
        %p268 = scmp.lt.s32.totalorder %s267, 99
        %s269 = scalar_select %p268, %s267, 99
        %s270 = scalar_lea.vmem %s1, %s269
        %s271 = sld [smem:[#allocation4 + %s28]]
        %p272 = scmp.eq.s32.totalorder %s28, 0
        // Predicated region
        $region49: #{tpu_custom_call.1} parent=43 // pred_check
          %p273 = pneg %p272
        $region50: #{tpu_custom_call.1} parent=43 // pred_check_branch
          %275 = sbr.rel (%p273) target = $region52
        $region51: #{tpu_custom_call.1} parent=43 // pred_region
          %v276 = vld [vmem:[%s2] sm:$0x1]
          %vm277 = vcmask 253952
          %278 = vst.msk [vmem:[#allocation2] sm:$0x1] %vm277, %v276
        $region52: #{tpu_custom_call.1} parent=43 // pred_fallthru
          _
        %v279 = vld [vmem:[%s270] sm:$0x1]
        %v280 = vld [vmem:[#allocation2] sm:$0x1]
        %v281 = vld [vmem:[%s6] sm:$0x1]
        %v282 = vld [vmem:[%s6 + $0x1] sm:$0x1]
        %v283 = vld [vmem:[%s6 + $0x2] sm:$0x1]
        %v284 = vld [vmem:[%s6 + $0x3] sm:$0x1]
        %v285 = vld [vmem:[%s6 + $0x4] sm:$0x1]
        %v286 = vld [vmem:[%s6 + $0x5] sm:$0x1]
        %v287 = vld [vmem:[%s4] sm:$0xff]
        %v288 = vld [vmem:[%s4 + $0x8] sm:$0xff]
        %v289 = vld [vmem:[%s4 + $0x10] sm:$0xff]
        %v290 = vld [vmem:[%s4 + $0x18] sm:$0xff]
        %vm291 = vcmask 261120
        %v293 = vsel %vm291, %v279, 0
        %295 = vmatprep.subr.mxu0 0.0
        %296 = vmatpush1.msra.mxu0 %v287
        %297 = vmatprep.subr.mxu0 0.0
        %298 = vmatpush1.msra.mxu0 %v288
        %299 = vmatprep.subr.mxu0 0.0
        %300 = vmatpush1.msra.mxu0 %v289
        %301 = vmatprep.subr.mxu0 0.0
        %302 = vmatpush1.msra.mxu0 %v290
        %303 = vmatprep.subr.mxu0 0.0
        %304 = vmatpush1.msra.mxu0 0.0
        %305 = vmatprep.subr.mxu0 0.0
        %306 = vmatpush1.msra.mxu0 0.0
        %307 = vmatprep.subr.mxu0 0.0
        %308 = vmatpush1.msra.mxu0 0.0
        %309 = vmatprep.subr.mxu0 0.0
        %310 = vmatpush1.msra.mxu0 0.0
        %311 = vmatprep.subr.mxu0 0.0
        %312 = vmatpush1.msra.mxu0 0.0
        %313 = vmatprep.subr.mxu0 0.0
        %314 = vmatpush1.msra.mxu0 0.0
        %315 = vmatprep.subr.mxu0 0.0
        %316 = vmatpush1.msra.mxu0 0.0
        %317 = vmatprep.subr.mxu0 0.0
        %318 = vmatpush1.msra.mxu0 0.0
        %319 = vmatprep.subr.mxu0 0.0
        %320 = vmatpush1.msra.mxu0 0.0
        %321 = vmatprep.subr.mxu0 0.0
        %322 = vmatpush1.msra.mxu0 0.0
        %323 = vmatprep.subr.mxu0 0.0
        %324 = vmatpush1.msra.mxu0 0.0
        %325 = vmatprep.subr.mxu0 0.0
        %326 = vmatpush1.msra.mxu0 0.0
        %327 = vmatprep.subr.mxu0 0.0
        %328 = vmatpush1.msra.mxu0 0.0
        %329 = vmatprep.subr.mxu0 0.0
        %330 = vmatpush1.msra.mxu0 0.0
        %331 = vmatprep.subr.mxu0 0.0
        %332 = vmatpush1.msra.mxu0 0.0
        %333 = vmatprep.subr.mxu0 0.0
        %334 = vmatpush1.msra.mxu0 0.0
        %335 = vmatprep.subr.mxu0 0.0
        %336 = vmatpush1.msra.mxu0 0.0
        %337 = vmatprep.subr.mxu0 0.0
        %338 = vmatpush1.msra.mxu0 0.0
        %339 = vmatprep.subr.mxu0 0.0
        %340 = vmatpush1.msra.mxu0 0.0
        %341 = vmatprep.subr.mxu0 0.0
        %342 = vmatpush1.msra.mxu0 0.0
        %343 = vmatprep.subr.mxu0 0.0
        %344 = vmatpush1.msra.mxu0 0.0
        %345 = vmatprep.subr.mxu0 0.0
        %346 = vmatpush1.msra.mxu0 0.0
        %347 = vmatprep.subr.mxu0 0.0
        %348 = vmatpush1.msra.mxu0 0.0
        %349 = vmatprep.subr.mxu0 0.0
        %350 = vmatpush1.msra.mxu0 0.0
        %351 = vmatprep.subr.mxu0 0.0
        %352 = vmatpush1.msra.mxu0 0.0
        %353 = vmatprep.subr.mxu0 0.0
        %354 = vmatpush1.msra.mxu0 0.0
        %355 = vmatprep.subr.mxu0 0.0
        %356 = vmatpush1.msra.mxu0 0.0
        %357 = vmatprep.subr.mxu0 0.0
        %358 = vmatpush1.msra.mxu0 0.0
        %359 = vmatprep.mubr.f32.mxu0 0.0
        %360 = vmatmul.mubr.f32.gmra.mrb[0].mxu0 %v293
        %v361 = vpop.f32.mrb[0].mxu0
        %v362 = vadd.f32 0.0, %v361
        %v363 = vpop.f32.mrb[0].mxu0
        %364 = vdwg.mxu0
        %v365 = vld [vmem:[%s4 + $0x20] sm:$0xff]
        %v366 = vld [vmem:[%s4 + $0x28] sm:$0xff]
        %v367 = vld [vmem:[%s4 + $0x30] sm:$0xff]
        %v368 = vld [vmem:[%s4 + $0x38] sm:$0xff]
        %v370 = vsel %vm291, %v280, 0
        %372 = vmatprep.subr.mxu0 0.0
        %373 = vmatpush1.msra.mxu0 %v365
        %374 = vmatprep.subr.mxu0 0.0
        %375 = vmatpush1.msra.mxu0 %v366
        %376 = vmatprep.subr.mxu0 0.0
        %377 = vmatpush1.msra.mxu0 %v367
        %378 = vmatprep.subr.mxu0 0.0
        %379 = vmatpush1.msra.mxu0 %v368
        %380 = vmatprep.subr.mxu0 0.0
        %381 = vmatpush1.msra.mxu0 0.0
        %382 = vmatprep.subr.mxu0 0.0
        %383 = vmatpush1.msra.mxu0 0.0
        %384 = vmatprep.subr.mxu0 0.0
        %385 = vmatpush1.msra.mxu0 0.0
        %386 = vmatprep.subr.mxu0 0.0
        %387 = vmatpush1.msra.mxu0 0.0
        %388 = vmatprep.subr.mxu0 0.0
        %389 = vmatpush1.msra.mxu0 0.0
        %390 = vmatprep.subr.mxu0 0.0
        %391 = vmatpush1.msra.mxu0 0.0
        %392 = vmatprep.subr.mxu0 0.0
        %393 = vmatpush1.msra.mxu0 0.0
        %394 = vmatprep.subr.mxu0 0.0
        %395 = vmatpush1.msra.mxu0 0.0
        %396 = vmatprep.subr.mxu0 0.0
        %397 = vmatpush1.msra.mxu0 0.0
        %398 = vmatprep.subr.mxu0 0.0
        %399 = vmatpush1.msra.mxu0 0.0
        %400 = vmatprep.subr.mxu0 0.0
        %401 = vmatpush1.msra.mxu0 0.0
        %402 = vmatprep.subr.mxu0 0.0
        %403 = vmatpush1.msra.mxu0 0.0
        %404 = vmatprep.subr.mxu0 0.0
        %405 = vmatpush1.msra.mxu0 0.0
        %406 = vmatprep.subr.mxu0 0.0
        %407 = vmatpush1.msra.mxu0 0.0
        %408 = vmatprep.subr.mxu0 0.0
        %409 = vmatpush1.msra.mxu0 0.0
        %410 = vmatprep.subr.mxu0 0.0
        %411 = vmatpush1.msra.mxu0 0.0
        %412 = vmatprep.subr.mxu0 0.0
        %413 = vmatpush1.msra.mxu0 0.0
        %414 = vmatprep.subr.mxu0 0.0
        %415 = vmatpush1.msra.mxu0 0.0
        %416 = vmatprep.subr.mxu0 0.0
        %417 = vmatpush1.msra.mxu0 0.0
        %418 = vmatprep.subr.mxu0 0.0
        %419 = vmatpush1.msra.mxu0 0.0
        %420 = vmatprep.subr.mxu0 0.0
        %421 = vmatpush1.msra.mxu0 0.0
        %422 = vmatprep.subr.mxu0 0.0
        %423 = vmatpush1.msra.mxu0 0.0
        %424 = vmatprep.subr.mxu0 0.0
        %425 = vmatpush1.msra.mxu0 0.0
        %426 = vmatprep.subr.mxu0 0.0
        %427 = vmatpush1.msra.mxu0 0.0
        %428 = vmatprep.subr.mxu0 0.0
        %429 = vmatpush1.msra.mxu0 0.0
        %430 = vmatprep.subr.mxu0 0.0
        %431 = vmatpush1.msra.mxu0 0.0
        %432 = vmatprep.subr.mxu0 0.0
        %433 = vmatpush1.msra.mxu0 0.0
        %434 = vmatprep.subr.mxu0 0.0
        %435 = vmatpush1.msra.mxu0 0.0
        %436 = vmatprep.mubr.f32.mxu0 0.0
        %437 = vmatmul.mubr.f32.gmra.mrb[0].mxu0 %v370
        %v438 = vpop.f32.mrb[0].mxu0
        %v439 = vadd.f32 0.0, %v438
        %v440 = vpop.f32.mrb[0].mxu0
        %441 = vdwg.mxu0
        %v442 = vadd.f32 %v362, %v439
        %v443 = vadd.f32 %v442, %v281
        %v444 = vlaneseq
        %v445 = vand.u32 %v444, 127
        %vm446 = vcmp.lt.s32.totalorder %v445, 25
        %v447 = vsel %vm446, %v443, -1e+30
        %vm448 = vcmask 253952
        %v449 = vsel %vm448, %v447, -inf
        %450 = vmax.xlane.f32.xlu0 %v449
        %v451 = vpop.xlane.xlu0 %450
        %v452 = vsub.f32 %v447, %v451
        %v453 = vmul.f32 %v452, 1.442695
        %v454 = vpow.pop %v453
        %v455 = vsel %vm448, %v454, 0.0
        %456 = vadd.xlane.f32.xlu0 %v455
        %v457 = vpop.xlane.xlu0 %456
        %v458 = vrcp.pop %v457
        %v459 = vmul.f32 %v454, %v458
        %v460 = vld [vmem:[#allocation5] sm:$0xff]
        %v461 = vld [vmem:[#allocation5 + $0x8] sm:$0xff]
        %v462 = vld [vmem:[#allocation5 + $0x10] sm:$0xff]
        %v463 = vld [vmem:[#allocation5 + $0x18] sm:$0xff]
        %v465 = vsel %vm291, %v459, 0
        %467 = vmatprep.subr.mxu0 0.0
        %468 = vmatpush1.msra.mxu0 %v460
        %469 = vmatprep.subr.mxu0 0.0
        %470 = vmatpush1.msra.mxu0 %v461
        %471 = vmatprep.subr.mxu0 0.0
        %472 = vmatpush1.msra.mxu0 %v462
        %473 = vmatprep.subr.mxu0 0.0
        %474 = vmatpush1.msra.mxu0 %v463
        %475 = vmatprep.subr.mxu0 0.0
        %476 = vmatpush1.msra.mxu0 0.0
        %477 = vmatprep.subr.mxu0 0.0
        %478 = vmatpush1.msra.mxu0 0.0
        %479 = vmatprep.subr.mxu0 0.0
        %480 = vmatpush1.msra.mxu0 0.0
        %481 = vmatprep.subr.mxu0 0.0
        %482 = vmatpush1.msra.mxu0 0.0
        %483 = vmatprep.subr.mxu0 0.0
        %484 = vmatpush1.msra.mxu0 0.0
        %485 = vmatprep.subr.mxu0 0.0
        %486 = vmatpush1.msra.mxu0 0.0
        %487 = vmatprep.subr.mxu0 0.0
        %488 = vmatpush1.msra.mxu0 0.0
        %489 = vmatprep.subr.mxu0 0.0
        %490 = vmatpush1.msra.mxu0 0.0
        %491 = vmatprep.subr.mxu0 0.0
        %492 = vmatpush1.msra.mxu0 0.0
        %493 = vmatprep.subr.mxu0 0.0
        %494 = vmatpush1.msra.mxu0 0.0
        %495 = vmatprep.subr.mxu0 0.0
        %496 = vmatpush1.msra.mxu0 0.0
        %497 = vmatprep.subr.mxu0 0.0
        %498 = vmatpush1.msra.mxu0 0.0
        %499 = vmatprep.subr.mxu0 0.0
        %500 = vmatpush1.msra.mxu0 0.0
        %501 = vmatprep.subr.mxu0 0.0
        %502 = vmatpush1.msra.mxu0 0.0
        %503 = vmatprep.subr.mxu0 0.0
        %504 = vmatpush1.msra.mxu0 0.0
        %505 = vmatprep.subr.mxu0 0.0
        %506 = vmatpush1.msra.mxu0 0.0
        %507 = vmatprep.subr.mxu0 0.0
        %508 = vmatpush1.msra.mxu0 0.0
        %509 = vmatprep.subr.mxu0 0.0
        %510 = vmatpush1.msra.mxu0 0.0
        %511 = vmatprep.subr.mxu0 0.0
        %512 = vmatpush1.msra.mxu0 0.0
        %513 = vmatprep.subr.mxu0 0.0
        %514 = vmatpush1.msra.mxu0 0.0
        %515 = vmatprep.subr.mxu0 0.0
        %516 = vmatpush1.msra.mxu0 0.0
        %517 = vmatprep.subr.mxu0 0.0
        %518 = vmatpush1.msra.mxu0 0.0
        %519 = vmatprep.subr.mxu0 0.0
        %520 = vmatpush1.msra.mxu0 0.0
        %521 = vmatprep.subr.mxu0 0.0
        %522 = vmatpush1.msra.mxu0 0.0
        %523 = vmatprep.subr.mxu0 0.0
        %524 = vmatpush1.msra.mxu0 0.0
        %525 = vmatprep.subr.mxu0 0.0
        %526 = vmatpush1.msra.mxu0 0.0
        %527 = vmatprep.subr.mxu0 0.0
        %528 = vmatpush1.msra.mxu0 0.0
        %529 = vmatprep.subr.mxu0 0.0
        %530 = vmatpush1.msra.mxu0 0.0
        %531 = vmatprep.mubr.f32.mxu0 0.0
        %532 = vmatmul.mubr.f32.gmra.mrb[0].mxu0 %v465
        %v533 = vpop.f32.mrb[0].mxu0
        %v534 = vadd.f32 0.0, %v533
        %v535 = vpop.f32.mrb[0].mxu0
        %536 = vdwg.mxu0
        %541 = vrot.lane.b32.xlu0 %v365, 96
        %v542 = vpop.permute.xlu0 %541
        %543 = vrot.lane.b32.xlu0 %v366, 96
        %v544 = vpop.permute.xlu0 %543
        %545 = vrot.lane.b32.xlu0 %v367, 96
        %v546 = vpop.permute.xlu0 %545
        %547 = vrot.lane.b32.xlu0 %v368, 96
        %v548 = vpop.permute.xlu0 %547
        %v554 = vsel %vm291, %v534, 0
        %556 = vmatprep.subr.mxu0 0.0
        %557 = vmatpush1.msra.mxu0 %v542
        %558 = vmatprep.subr.mxu0 0.0
        %559 = vmatpush1.msra.mxu0 %v544
        %560 = vmatprep.subr.mxu0 0.0
        %561 = vmatpush1.msra.mxu0 %v546
        %562 = vmatprep.subr.mxu0 0.0
        %563 = vmatpush1.msra.mxu0 %v548
        %564 = vmatprep.subr.mxu0 0.0
        %565 = vmatpush1.msra.mxu0 0.0
        %566 = vmatprep.subr.mxu0 0.0
        %567 = vmatpush1.msra.mxu0 0.0
        %568 = vmatprep.subr.mxu0 0.0
        %569 = vmatpush1.msra.mxu0 0.0
        %570 = vmatprep.subr.mxu0 0.0
        %571 = vmatpush1.msra.mxu0 0.0
        %572 = vmatprep.subr.mxu0 0.0
        %573 = vmatpush1.msra.mxu0 0.0
        %574 = vmatprep.subr.mxu0 0.0
        %575 = vmatpush1.msra.mxu0 0.0
        %576 = vmatprep.subr.mxu0 0.0
        %577 = vmatpush1.msra.mxu0 0.0
        %578 = vmatprep.subr.mxu0 0.0
        %579 = vmatpush1.msra.mxu0 0.0
        %580 = vmatprep.subr.mxu0 0.0
        %581 = vmatpush1.msra.mxu0 0.0
        %582 = vmatprep.subr.mxu0 0.0
        %583 = vmatpush1.msra.mxu0 0.0
        %584 = vmatprep.subr.mxu0 0.0
        %585 = vmatpush1.msra.mxu0 0.0
        %586 = vmatprep.subr.mxu0 0.0
        %587 = vmatpush1.msra.mxu0 0.0
        %588 = vmatprep.subr.mxu0 0.0
        %589 = vmatpush1.msra.mxu0 0.0
        %590 = vmatprep.subr.mxu0 0.0
        %591 = vmatpush1.msra.mxu0 0.0
        %592 = vmatprep.subr.mxu0 0.0
        %593 = vmatpush1.msra.mxu0 0.0
        %594 = vmatprep.subr.mxu0 0.0
        %595 = vmatpush1.msra.mxu0 0.0
        %596 = vmatprep.subr.mxu0 0.0
        %597 = vmatpush1.msra.mxu0 0.0
        %598 = vmatprep.subr.mxu0 0.0
        %599 = vmatpush1.msra.mxu0 0.0
        %600 = vmatprep.subr.mxu0 0.0
        %601 = vmatpush1.msra.mxu0 0.0
        %602 = vmatprep.subr.mxu0 0.0
        %603 = vmatpush1.msra.mxu0 0.0
        %604 = vmatprep.subr.mxu0 0.0
        %605 = vmatpush1.msra.mxu0 0.0
        %606 = vmatprep.subr.mxu0 0.0
        %607 = vmatpush1.msra.mxu0 0.0
        %608 = vmatprep.subr.mxu0 0.0
        %609 = vmatpush1.msra.mxu0 0.0
        %610 = vmatprep.subr.mxu0 0.0
        %611 = vmatpush1.msra.mxu0 0.0
        %612 = vmatprep.subr.mxu0 0.0
        %613 = vmatpush1.msra.mxu0 0.0
        %614 = vmatprep.subr.mxu0 0.0
        %615 = vmatpush1.msra.mxu0 0.0
        %616 = vmatprep.subr.mxu0 0.0
        %617 = vmatpush1.msra.mxu0 0.0
        %618 = vmatprep.subr.mxu0 0.0
        %619 = vmatpush1.msra.mxu0 0.0
        %620 = vmatprep.mubr.f32.mxu0 0.0
        %621 = vmatmul.mubr.f32.gmra.mrb[0].mxu0 %v554
        %v622 = vpop.f32.mrb[0].mxu0
        %v623 = vadd.f32 0.0, %v622
        %v624 = vpop.f32.mrb[0].mxu0
        %625 = vdwg.mxu0
        %627 = vrot.lane.b32.xlu0 %v623, 32
        %v628 = vpop.permute.xlu0 %627
        %v630 = vadd.f32 %v362, %v628
        %632 = vrot.lane.b32.xlu0 %v282, 32
        %v633 = vpop.permute.xlu0 %632
        %v635 = vadd.f32 %v630, %v633
        %v636 = vmax.f32 %v635, 0.0
        %v637 = vld [vmem:[%s5] sm:$0xff]
        %v638 = vld [vmem:[%s5 + $0x8] sm:$0xff]
        %v639 = vld [vmem:[%s5 + $0x10] sm:$0xff]
        %v640 = vld [vmem:[%s5 + $0x18] sm:$0xff]
        %642 = vrot.lane.b32.xlu0 %v636, 96
        %v643 = vpop.permute.xlu0 %642
        %v644 = vsel %vm291, %v643, 0
        %646 = vmatprep.subr.mxu0 0.0
        %647 = vmatpush1.msra.mxu0 %v637
        %648 = vmatprep.subr.mxu0 0.0
        %649 = vmatpush1.msra.mxu0 %v638
        %650 = vmatprep.subr.mxu0 0.0
        %651 = vmatpush1.msra.mxu0 %v639
        %652 = vmatprep.subr.mxu0 0.0
        %653 = vmatpush1.msra.mxu0 %v640
        %654 = vmatprep.subr.mxu0 0.0
        %655 = vmatpush1.msra.mxu0 0.0
        %656 = vmatprep.subr.mxu0 0.0
        %657 = vmatpush1.msra.mxu0 0.0
        %658 = vmatprep.subr.mxu0 0.0
        %659 = vmatpush1.msra.mxu0 0.0
        %660 = vmatprep.subr.mxu0 0.0
        %661 = vmatpush1.msra.mxu0 0.0
        %662 = vmatprep.subr.mxu0 0.0
        %663 = vmatpush1.msra.mxu0 0.0
        %664 = vmatprep.subr.mxu0 0.0
        %665 = vmatpush1.msra.mxu0 0.0
        %666 = vmatprep.subr.mxu0 0.0
        %667 = vmatpush1.msra.mxu0 0.0
        %668 = vmatprep.subr.mxu0 0.0
        %669 = vmatpush1.msra.mxu0 0.0
        %670 = vmatprep.subr.mxu0 0.0
        %671 = vmatpush1.msra.mxu0 0.0
        %672 = vmatprep.subr.mxu0 0.0
        %673 = vmatpush1.msra.mxu0 0.0
        %674 = vmatprep.subr.mxu0 0.0
        %675 = vmatpush1.msra.mxu0 0.0
        %676 = vmatprep.subr.mxu0 0.0
        %677 = vmatpush1.msra.mxu0 0.0
        %678 = vmatprep.subr.mxu0 0.0
        %679 = vmatpush1.msra.mxu0 0.0
        %680 = vmatprep.subr.mxu0 0.0
        %681 = vmatpush1.msra.mxu0 0.0
        %682 = vmatprep.subr.mxu0 0.0
        %683 = vmatpush1.msra.mxu0 0.0
        %684 = vmatprep.subr.mxu0 0.0
        %685 = vmatpush1.msra.mxu0 0.0
        %686 = vmatprep.subr.mxu0 0.0
        %687 = vmatpush1.msra.mxu0 0.0
        %688 = vmatprep.subr.mxu0 0.0
        %689 = vmatpush1.msra.mxu0 0.0
        %690 = vmatprep.subr.mxu0 0.0
        %691 = vmatpush1.msra.mxu0 0.0
        %692 = vmatprep.subr.mxu0 0.0
        %693 = vmatpush1.msra.mxu0 0.0
        %694 = vmatprep.subr.mxu0 0.0
        %695 = vmatpush1.msra.mxu0 0.0
        %696 = vmatprep.subr.mxu0 0.0
        %697 = vmatpush1.msra.mxu0 0.0
        %698 = vmatprep.subr.mxu0 0.0
        %699 = vmatpush1.msra.mxu0 0.0
        %700 = vmatprep.subr.mxu0 0.0
        %701 = vmatpush1.msra.mxu0 0.0
        %702 = vmatprep.subr.mxu0 0.0
        %703 = vmatpush1.msra.mxu0 0.0
        %704 = vmatprep.subr.mxu0 0.0
        %705 = vmatpush1.msra.mxu0 0.0
        %706 = vmatprep.subr.mxu0 0.0
        %707 = vmatpush1.msra.mxu0 0.0
        %708 = vmatprep.subr.mxu0 0.0
        %709 = vmatpush1.msra.mxu0 0.0
        %710 = vmatprep.mubr.f32.mxu0 0.0
        %711 = vmatmul.mubr.f32.gmra.mrb[0].mxu0 %v644
        %v712 = vpop.f32.mrb[0].mxu0
        %v713 = vadd.f32 %v283, %v712
        %v714 = vpop.f32.mrb[0].mxu0
        %715 = vdwg.mxu0
        %v716 = vld [vmem:[%s5 + $0x20] sm:$0xff]
        %v717 = vld [vmem:[%s5 + $0x28] sm:$0xff]
        %v718 = vld [vmem:[%s5 + $0x30] sm:$0xff]
        %v719 = vld [vmem:[%s5 + $0x38] sm:$0xff]
        %720 = vmatprep.subr.mxu0 0.0
        %721 = vmatpush1.msra.mxu0 %v716
        %722 = vmatprep.subr.mxu0 0.0
        %723 = vmatpush1.msra.mxu0 %v717
        %724 = vmatprep.subr.mxu0 0.0
        %725 = vmatpush1.msra.mxu0 %v718
        %726 = vmatprep.subr.mxu0 0.0
        %727 = vmatpush1.msra.mxu0 %v719
        %728 = vmatprep.subr.mxu0 0.0
        %729 = vmatpush1.msra.mxu0 0.0
        %730 = vmatprep.subr.mxu0 0.0
        %731 = vmatpush1.msra.mxu0 0.0
        %732 = vmatprep.subr.mxu0 0.0
        %733 = vmatpush1.msra.mxu0 0.0
        %734 = vmatprep.subr.mxu0 0.0
        %735 = vmatpush1.msra.mxu0 0.0
        %736 = vmatprep.subr.mxu0 0.0
        %737 = vmatpush1.msra.mxu0 0.0
        %738 = vmatprep.subr.mxu0 0.0
        %739 = vmatpush1.msra.mxu0 0.0
        %740 = vmatprep.subr.mxu0 0.0
        %741 = vmatpush1.msra.mxu0 0.0
        %742 = vmatprep.subr.mxu0 0.0
        %743 = vmatpush1.msra.mxu0 0.0
        %744 = vmatprep.subr.mxu0 0.0
        %745 = vmatpush1.msra.mxu0 0.0
        %746 = vmatprep.subr.mxu0 0.0
        %747 = vmatpush1.msra.mxu0 0.0
        %748 = vmatprep.subr.mxu0 0.0
        %749 = vmatpush1.msra.mxu0 0.0
        %750 = vmatprep.subr.mxu0 0.0
        %751 = vmatpush1.msra.mxu0 0.0
        %752 = vmatprep.subr.mxu0 0.0
        %753 = vmatpush1.msra.mxu0 0.0
        %754 = vmatprep.subr.mxu0 0.0
        %755 = vmatpush1.msra.mxu0 0.0
        %756 = vmatprep.subr.mxu0 0.0
        %757 = vmatpush1.msra.mxu0 0.0
        %758 = vmatprep.subr.mxu0 0.0
        %759 = vmatpush1.msra.mxu0 0.0
        %760 = vmatprep.subr.mxu0 0.0
        %761 = vmatpush1.msra.mxu0 0.0
        %762 = vmatprep.subr.mxu0 0.0
        %763 = vmatpush1.msra.mxu0 0.0
        %764 = vmatprep.subr.mxu0 0.0
        %765 = vmatpush1.msra.mxu0 0.0
        %766 = vmatprep.subr.mxu0 0.0
        %767 = vmatpush1.msra.mxu0 0.0
        %768 = vmatprep.subr.mxu0 0.0
        %769 = vmatpush1.msra.mxu0 0.0
        %770 = vmatprep.subr.mxu0 0.0
        %771 = vmatpush1.msra.mxu0 0.0
        %772 = vmatprep.subr.mxu0 0.0
        %773 = vmatpush1.msra.mxu0 0.0
        %774 = vmatprep.subr.mxu0 0.0
        %775 = vmatpush1.msra.mxu0 0.0
        %776 = vmatprep.subr.mxu0 0.0
        %777 = vmatpush1.msra.mxu0 0.0
        %778 = vmatprep.subr.mxu0 0.0
        %779 = vmatpush1.msra.mxu0 0.0
        %780 = vmatprep.subr.mxu0 0.0
        %781 = vmatpush1.msra.mxu0 0.0
        %782 = vmatprep.subr.mxu0 0.0
        %783 = vmatpush1.msra.mxu0 0.0
        %784 = vmatprep.mubr.f32.mxu0 0.0
        %785 = vmatmul.mubr.f32.gmra.mrb[0].mxu0 %v370
        %v786 = vpop.f32.mrb[0].mxu0
        %v787 = vadd.f32 %v284, %v786
        %v788 = vpop.f32.mrb[0].mxu0
        %789 = vdwg.mxu0
        %v790 = vadd.f32 %v713, %v787
        %v791 = vxor.u32 %v790, 2147483648
        %v792 = vmul.f32 %v791, 1.442695
        %v793 = vpow.pop %v792
        %v794 = vadd.f32 %v793, 1.0
        %v795 = vrcp.pop %v794
        %v796 = vmul.f32 1.0, %v795
        %798 = vrot.lane.b32.xlu0 %v787, 64
        %v799 = vpop.permute.xlu0 %798
        %v801 = vmul.f32 %v796, %v799
        %803 = vrot.lane.b32.xlu0 %v801, 64
        %v804 = vpop.permute.xlu0 %803
        %v806 = vadd.f32 %v713, %v804
        %v807 = vtanh.pop %v806
        %v808 = vsub.f32 1.0, %v796
        %810 = vrot.lane.b32.xlu0 %v807, 96
        %v811 = vpop.permute.xlu0 %810
        %v813 = vmul.f32 %v808, %v811
        %v814 = vlaneseq
        %v815 = vshrl.u32 %v814, 7
        %v816 = vsub.s32 0, %v815
        %v817 = vrot.slane %v280, %v816
        %818 = vrot.lane.b32.xlu0 %v817, 32
        %v819 = vpop.permute.xlu0 %818
        %v821 = vmul.f32 %v796, %v819
        %v822 = vadd.f32 %v813, %v821
        %824 = vrot.lane.b32.xlu0 %v822, 96
        %v825 = vpop.permute.xlu0 %824
        %827 = vst.msk [vmem:[#allocation2] sm:$0x1] %vm448, %v825
        %829 = vrot.lane.b32.xlu0 %v285, 32
        %v830 = vpop.permute.xlu0 %829
        %v832 = vmul.f32 %v822, %v830
        %834 = vrot.lane.b32.xlu0 %v832, 96
        %v835 = vpop.permute.xlu0 %834
        %v837 = vsel %vm448, %v835, 0.0
        %838 = vadd.xlane.f32.xlu0 %v837
        %v839 = vpop.xlane.xlu0 %838
        %v840 = vadd.f32 %v839, %v286
        %841 = vst.msk [vmem:[%s266] sm:$0x1] %vm448, %v459
        %vm842 = vcmask 516352
        %843 = vst.msk [vmem:[%s266] sm:$0x1] %vm842, %v822
        %845 = vset.pattern.permute.xlu0 0
        %846 = vperm.xlu0 %845, %v840
        %v847 = vpop.permute.xlu0 %846
        %vm849 = vcmask 1040896
        %850 = vst.msk [vmem:[%s266] sm:$0x1] %vm849, %v847
        %s851 = sand.u32 %s169, 1
        %s852 = scalar_lea.sflag [#allocation7], %s851
        %s853 = sand.u32 %s169, 1
        %s854 = scalar_lea.vmem [#allocation8], %s853
        // Predicated region
        $region53: #{tpu_custom_call.1} parent=43 // pred_check
          %p855 = pneg %p179
        $region54: #{tpu_custom_call.1} parent=43 // pred_check_branch
          %857 = sbr.rel (%p855) target = $region56
        $region55: #{tpu_custom_call.1} parent=43 // pred_region
          %s859 = ssub.s32 16, 16
          %860 = vsyncadd %s852, %s859
          %s861 = smul.addr %s28, 16
          %s862 = scalar_lea.hbm %s7, %s861
          %s864 = sshll.u32 %s854, 4
          %s865 = int_to_ptr.vmem [resolvable:$true] %s864
          %867 = dma.vmem_to_hbm [thread:$0]  %s865, 16, %s862, %s852
        $region56: #{tpu_custom_call.1} parent=43 // pred_fallthru
          _
      $region44: #{tpu_custom_call.1} parent=5 // pred_fallthru
        _
      %p868 = scmp.le.s32.totalorder 2, %s23
      // Predicated region
      $region57: #{tpu_custom_call.1} parent=5 // pred_check
        %p869 = pneg %p868
      $region58: #{tpu_custom_call.1} parent=5 // pred_check_branch
        %871 = sbr.rel (%p869) target = $region60
      $region59: #{tpu_custom_call.1} parent=5 // pred_region
        %s872 = ssub.s32 %s23, 2
        // Predicated region
        $region61: #{tpu_custom_call.1} parent=59 // pred_check
          %p873 = pneg %p185
        $region62: #{tpu_custom_call.1} parent=59 // pred_check_branch
          %875 = sbr.rel (%p873) target = $region64
        $region63: #{tpu_custom_call.1} parent=59 // pred_region
          %s876 = sand.u32 %s170, 1
          %s877 = scalar_lea.sflag [#allocation7], %s876
          %s878 = sand.u32 %s170, 1
          %s879 = scalar_lea.vmem [#allocation8], %s878
          %880 = dma.done %s877, 16
        $region64: #{tpu_custom_call.1} parent=59 // pred_fallthru
          _
      $region60: #{tpu_custom_call.1} parent=5 // pred_fallthru
        _
    $region6: #{tpu_custom_call.1} parent=1 // loop_footer
      %s27 = sadd.s32 1, %s23
    $region7: #{tpu_custom_call.1} parent=1 // loop_footer_branch
      %22 = sbr.rel target = $region3
    $region8: #{tpu_custom_call.1} parent=1 // loop_exit
      _
    %881 = vsyncpa [#allocation6], 1
    %s882 = scalar_lea.sflag [#allocation6], 1
    %883 = vsyncpa %s882, 1
    %884 = vsyncpa [#allocation7], 1
    %s885 = scalar_lea.sflag [#allocation7], 1
    %886 = vsyncpa %s885, 1

</llo_original>
